<compile_context>
chip_gen: v7x
topology: tpu7x:2x2x1
jax: 0.10.0
libtpu: 0.0.40
codegen_flags: <defaults>
</compile_context>

<pallas_src>
import jax
import jax.numpy as jnp
from jax.experimental import pallas as pl
from jax.experimental.pallas import tpu as pltpu

EPS = 1e-6        # norm epsilon from the module
BN_EPS = 1e-5     # nn.BatchNorm1d default eps

_MIN_GRID = 8     # keep >= ~4 grid steps per TensorCore on 2-core parts


def _round_up(x, m):
    return ((x + m - 1) // m) * m


def _vmem_limit_bytes():
    cap = 64 * 1024 * 1024                       # conservative default (v7x)
    try:
        cap = int(getattr(pltpu.get_tpu_info(), "vmem_capacity_bytes", cap))
    except Exception:
        pass
    # ~20% headroom for compiler-internal scratch:
    #   v7x  (64 MiB)  -> ~51 MiB,   v5e/v6e (128 MiB) -> ~102 MiB.
    return max(32 * 1024 * 1024, int(cap * 0.8))


def _per_channel_vmem_bytes(B, N, itemsize):
    """Honest per-channel VMEM cost of one grid step (incl. layout padding)."""
    lanes = _round_up(N, 128)
    io = B * 8 * lanes * itemsize      # x / out block: (3 -> 8) sublane padding
    f32 = B * 8 * lanes * 4            # transient f32 (x^2) + norm/scale planes
    return 4 * io + 2 * f32            # double-buffered in + out, plus temps


def _legal_bc(bc):
    # Channel blocks that never straddle an 8-sublane tile of the [1, C, 1]
    # gamma/beta rows and keep the [B, Cb, N] intermediates sublane-dense.
    return bc in (1, 2, 4) or bc % 8 == 0


def _pick_block_c(C, per_channel_bytes, vmem_limit):
    budget = int(vmem_limit * 0.7)
    max_bc = max(1, min(C, budget // max(1, per_channel_bytes)))
    if C >= _MIN_GRID:                 # keep >= _MIN_GRID grid steps if possible
        max_bc = min(max_bc, max(1, C // _MIN_GRID))
    legal = [bc for bc in range(1, max_bc + 1) if _legal_bc(bc)]
    best_any = max(legal)
    legal_div = [bc for bc in legal if C % bc == 0]
    best_div = max(legal_div) if legal_div else 1
    # Prefer an exact divisor (no channel padding) unless padding buys a
    # much larger block.
    return best_div if 2 * best_div >= best_any else best_any


def _vn_batchnorm_kernel(gamma_ref, beta_ref, x_ref, o_ref):
    B, Cb, V, N = x_ref.shape
    inv_count = 1.0 / float(B * N)
    c0 = pl.program_id(0) * Cb

    # ||x||_2 over the 3-vector axis: sublane reduce; result is a dense
    # [B, Cb, N] plane (channels on sublanes, points on lanes).
    xsq = x_ref[...].astype(jnp.float32)                    # [B, Cb, 3, N]
    ss = jnp.sum(xsq * xsq, axis=2)                         # [B, Cb, N]
    norm = jnp.sqrt(ss) + EPS                               # exact module semantics

    # Per-channel BN statistics over (B, N): two-pass, biased variance
    # (what BatchNorm1d uses for normalization in training mode).
    mean = jnp.sum(norm, axis=(0, 2), keepdims=True) * inv_count    # [1, Cb, 1]
    d = norm - mean
    var = jnp.sum(d * d, axis=(0, 2), keepdims=True) * inv_count    # [1, Cb, 1]
    inv_std = jax.lax.rsqrt(var + BN_EPS)                           # EUP rsqrt

    # Per-channel affine params for this block: dynamic sublane slice of the
    # resident [1, C, 1] rows (no per-channel (8,128) tiles in VMEM).
    gamma = gamma_ref[:, pl.ds(c0, Cb), :]                  # [1, Cb, 1]
    beta = beta_ref[:, pl.ds(c0, Cb), :]                    # [1, Cb, 1]

    # out = x / norm * ((norm - mean) * inv_std * gamma + beta)
    #     = x * (g + (beta - g*mean) * (1/norm)),   g = gamma * inv_std
    # -> ONE reciprocal per (b, c, n); everything else is fused mul/add.
    #    (pl.reciprocal(..., approx=True) would move it onto the EUP slot but
    #     loosens the tolerance for near-zero vectors; keep it exact.)
    g = gamma * inv_std
    scale = g + (beta - g * mean) * pl.reciprocal(norm)     # [B, Cb, N]

    # Re-read x so its f32 upcast fuses into this multiply instead of keeping
    # a full f32 copy of the block live across the statistics pass.
    o_ref[...] = (x_ref[...].astype(jnp.float32)
                  * scale[:, :, None, :]).astype(o_ref.dtype)


def vn_batchnorm(x, gamma, beta, *, block_c=None):
    """Forward of the VN BatchNorm module.  x: [B, C, 3, N]; gamma, beta: [C]."""
    B, C, V, N = x.shape
    assert V == 3
    itemsize = jnp.dtype(x.dtype).itemsize

    vmem_limit = _vmem_limit_bytes()
    if block_c is None:
        block_c = _pick_block_c(C, _per_channel_vmem_bytes(B, N, itemsize),
                                vmem_limit)
    # TODO(synk): when a single channel slab (B*3*N) exceeds the VMEM budget,
    # add a second ('arbitrary') grid axis over N with a stats-accumulate +
    # apply two-phase scheme instead of one full-channel block.

    # Pad C so block_c always divides it; padded channels are all-zero and
    # their (per-channel, hence independent) BN output is sliced off below.
    C_pad = _round_up(C, block_c)
    gamma_f = jnp.asarray(gamma, jnp.float32).reshape(C)
    beta_f = jnp.asarray(beta, jnp.float32).reshape(C)
    if C_pad != C:
        pad = C_pad - C
        x = jnp.pad(x, ((0, 0), (0, pad), (0, 0), (0, 0)))
        gamma_f = jnp.pad(gamma_f, (0, pad), constant_values=1.0)
        beta_f = jnp.pad(beta_f, (0, pad))
    gamma_r = gamma_f.reshape(1, C_pad, 1)
    beta_r = beta_f.reshape(1, C_pad, 1)

    out = pl.pallas_call(
        _vn_batchnorm_kernel,
        out_shape=jax.ShapeDtypeStruct((B, C_pad, V, N), x.dtype),
        grid_spec=pltpu.PrefetchScalarGridSpec(
            num_scalar_prefetch=0,
            grid=(C_pad // block_c,),
            in_specs=[
                # gamma / beta: fully resident, channels on the sublane axis.
                pl.BlockSpec((1, C_pad, 1), lambda c: (0, 0, 0)),
                pl.BlockSpec((1, C_pad, 1), lambda c: (0, 0, 0)),
                # Native-layout x block: one channel group per grid step.
                pl.BlockSpec((B, block_c, V, N), lambda c: (0, c, 0, 0)),
            ],
            out_specs=pl.BlockSpec((B, block_c, V, N), lambda c: (0, c, 0, 0)),
        ),
        compiler_params=pltpu.CompilerParams(
            dimension_semantics=("parallel",),
            vmem_limit_bytes=vmem_limit,
        ),
    )(gamma_r, beta_r, x)

    if C_pad != C:
        out = out[:, :C]
    return out


def vn_batchnorm_ref(x, gamma, beta):
    """Pure-JAX reference mirroring the PyTorch forward (training mode)."""
    norm = jnp.linalg.norm(x, axis=2) + EPS                   # [B, C, N]
    mean = jnp.mean(norm, axis=(0, 2), keepdims=True)
    var = jnp.mean((norm - mean) ** 2, axis=(0, 2), keepdims=True)
    norm_bn = (norm - mean) / jnp.sqrt(var + BN_EPS)
    norm_bn = norm_bn * gamma[None, :, None] + beta[None, :, None]
    return x / norm[:, :, None, :] * norm_bn[:, :, None, :]


# TODO(synk): BatchNorm1d running_mean/running_var momentum updates (training
# state) and eval-mode use of running stats are not produced; only the
# training-mode forward output is computed.

if __name__ == "__main__":
    key = jax.random.PRNGKey(0)

    # Primary small test shape consistent with the module: [B, N_feat, 3, N_samples].
    B, C, V, N = 2, 4, 3, 16
    x = jax.random.normal(key, (B, C, V, N), dtype=jnp.float32)
    gamma = 1.0 + 0.1 * jnp.arange(C, dtype=jnp.float32)
    beta = 0.05 * jnp.arange(C, dtype=jnp.float32) - 0.1

    out = vn_batchnorm(x, gamma, beta)
    out = jax.block_until_ready(out)
    ref = vn_batchnorm_ref(x, gamma, beta)
    assert out.shape == (B, C, V, N)
    assert jnp.allclose(out, ref, atol=1e-4, rtol=1e-4), "mismatch vs reference"

    # Second check exercising a multi-step channel grid (block_c=2, grid=8),
    # lane-dense N, and the dynamic gamma/beta sublane slice at offsets > 0.
    B2, C2, N2 = 2, 16, 128
    x2 = jax.random.normal(jax.random.PRNGKey(1), (B2, C2, V, N2), dtype=jnp.float32)
    gamma2 = 1.0 + 0.05 * jnp.arange(C2, dtype=jnp.float32)
    beta2 = 0.02 * jnp.arange(C2, dtype=jnp.float32) - 0.1
    out2 = jax.block_until_ready(vn_batchnorm(x2, gamma2, beta2))
    ref2 = vn_batchnorm_ref(x2, gamma2, beta2)
    assert jnp.allclose(out2, ref2, atol=1e-4, rtol=1e-4), "mismatch (grid>1)"

    print("KERNEL_OK")
</pallas_src>

<mosaic_0001>
module attributes {stable_mosaic.version = 11 : i64} {
  func.func @_vn_batchnorm_kernel(%arg0: i32, %arg1: memref<1x4x1xf32, #tpu.memory_space<vmem>>, %arg2: memref<1x4x1xf32, #tpu.memory_space<vmem>>, %arg3: memref<2x4x3x16xf32, #tpu.memory_space<vmem>>, %arg4: memref<2x4x3x16xf32, #tpu.memory_space<vmem>>) attributes {dimension_semantics = [#tpu.dimension_semantics<parallel>], iteration_bounds = array<i64: 1>, scalar_prefetch = 0 : i64, scratch_operands = 0 : i64, tpu.core_type = #tpu.core_type<tc>, window_params = [{pipeline_mode = #tpu.pipeline_mode<synchronous>, transform_indices = @transform_0, window_bounds = array<i64: 1, 4, 1>}, {pipeline_mode = #tpu.pipeline_mode<synchronous>, transform_indices = @transform_1, window_bounds = array<i64: 1, 4, 1>}, {transform_indices = @transform_2, window_bounds = array<i64: 2, 4, 3, 16>}, {transform_indices = @transform_3, window_bounds = array<i64: 2, 4, 3, 16>}]} {
    %c4_i32 = arith.constant 4 : i32
    %0 = arith.muli %arg0, %c4_i32 : i32
    %c0 = arith.constant 0 : index
    %c0_0 = arith.constant 0 : index
    %c0_1 = arith.constant 0 : index
    %c0_2 = arith.constant 0 : index
    %1 = vector.load %arg3[%c0, %c0_0, %c0_1, %c0_2] : memref<2x4x3x16xf32, #tpu.memory_space<vmem>>, vector<2x4x3x16xf32>
    %2 = arith.mulf %1, %1 : vector<2x4x3x16xf32>
    %cst = arith.constant dense<0.000000e+00> : vector<2x4x16xf32>
    %3 = vector.multi_reduction <add>, %2, %cst [2] : vector<2x4x3x16xf32> to vector<2x4x16xf32>
    %4 = math.sqrt %3 : vector<2x4x16xf32>
    %cst_3 = arith.constant 9.99999997E-7 : f32
    %5 = vector.broadcast %cst_3 : f32 to vector<2x4x16xf32>
    %6 = arith.addf %4, %5 : vector<2x4x16xf32>
    %cst_4 = arith.constant dense<0.000000e+00> : vector<4xf32>
    %7 = vector.multi_reduction <add>, %6, %cst_4 [0, 2] : vector<2x4x16xf32> to vector<4xf32>
    %8 = vector.shape_cast %7 : vector<4xf32> to vector<1x4x1xf32>
    %cst_5 = arith.constant 3.125000e-02 : f32
    %9 = vector.broadcast %cst_5 : f32 to vector<1x4x1xf32>
    %10 = arith.mulf %8, %9 : vector<1x4x1xf32>
    %11 = vector.broadcast %10 : vector<1x4x1xf32> to vector<2x4x16xf32>
    %12 = arith.subf %6, %11 : vector<2x4x16xf32>
    %13 = arith.mulf %12, %12 : vector<2x4x16xf32>
    %cst_6 = arith.constant dense<0.000000e+00> : vector<4xf32>
    %14 = vector.multi_reduction <add>, %13, %cst_6 [0, 2] : vector<2x4x16xf32> to vector<4xf32>
    %15 = vector.shape_cast %14 : vector<4xf32> to vector<1x4x1xf32>
    %cst_7 = arith.constant 3.125000e-02 : f32
    %16 = vector.broadcast %cst_7 : f32 to vector<1x4x1xf32>
    %17 = arith.mulf %15, %16 : vector<1x4x1xf32>
    %cst_8 = arith.constant 9.99999974E-6 : f32
    %18 = vector.broadcast %cst_8 : f32 to vector<1x4x1xf32>
    %19 = arith.addf %17, %18 : vector<1x4x1xf32>
    %20 = math.rsqrt %19 : vector<1x4x1xf32>
    %c0_9 = arith.constant 0 : index
    %21 = arith.index_cast %0 : i32 to index
    %c0_10 = arith.constant 0 : index
    %22 = vector.load %arg1[%c0_9, %21, %c0_10] : memref<1x4x1xf32, #tpu.memory_space<vmem>>, vector<1x4x1xf32>
    %c0_11 = arith.constant 0 : index
    %23 = arith.index_cast %0 : i32 to index
    %c0_12 = arith.constant 0 : index
    %24 = vector.load %arg2[%c0_11, %23, %c0_12] : memref<1x4x1xf32, #tpu.memory_space<vmem>>, vector<1x4x1xf32>
    %25 = arith.mulf %22, %20 : vector<1x4x1xf32>
    %26 = arith.mulf %25, %10 : vector<1x4x1xf32>
    %27 = arith.subf %24, %26 : vector<1x4x1xf32>
    %28 = tpu.reciprocal %6 : vector<2x4x16xf32> -> vector<2x4x16xf32>
    %29 = vector.broadcast %27 : vector<1x4x1xf32> to vector<2x4x16xf32>
    %30 = arith.mulf %29, %28 : vector<2x4x16xf32>
    %31 = vector.broadcast %25 : vector<1x4x1xf32> to vector<2x4x16xf32>
    %32 = arith.addf %31, %30 : vector<2x4x16xf32>
    %c0_13 = arith.constant 0 : index
    %c0_14 = arith.constant 0 : index
    %c0_15 = arith.constant 0 : index
    %c0_16 = arith.constant 0 : index
    %33 = vector.load %arg3[%c0_13, %c0_14, %c0_15, %c0_16] : memref<2x4x3x16xf32, #tpu.memory_space<vmem>>, vector<2x4x3x16xf32>
    %34 = vector.shape_cast %32 : vector<2x4x16xf32> to vector<2x4x1x16xf32>
    %35 = vector.broadcast %34 : vector<2x4x1x16xf32> to vector<2x4x3x16xf32>
    %36 = arith.mulf %33, %35 : vector<2x4x3x16xf32>
    %c0_17 = arith.constant 0 : index
    %c0_18 = arith.constant 0 : index
    %c0_19 = arith.constant 0 : index
    %c0_20 = arith.constant 0 : index
    %37 = vector.load %arg4[%c0_17, %c0_18, %c0_19, %c0_20] : memref<2x4x3x16xf32, #tpu.memory_space<vmem>>, vector<2x4x3x16xf32>
    tpu.vector_store %arg4[%c0_17, %c0_18, %c0_19, %c0_20], %36 {strides = array<i32>} : memref<2x4x3x16xf32, #tpu.memory_space<vmem>>, vector<2x4x3x16xf32>,
    return
  }
  func.func @transform_0(%arg0: i32) -> (i32, i32, i32) {
    %c0_i32 = arith.constant 0 : i32
    %c0_i32_0 = arith.constant 0 : i32
    %c0_i32_1 = arith.constant 0 : i32
    %c0_i32_2 = arith.constant 0 : i32
    return %c0_i32, %c0_i32_0, %c0_i32_1 : i32, i32, i32
  }
  func.func @transform_1(%arg0: i32) -> (i32, i32, i32) {
    %c0_i32 = arith.constant 0 : i32
    %c0_i32_0 = arith.constant 0 : i32
    %c0_i32_1 = arith.constant 0 : i32
    %c0_i32_2 = arith.constant 0 : i32
    return %c0_i32, %c0_i32_0, %c0_i32_1 : i32, i32, i32
  }
  func.func @transform_2(%arg0: i32) -> (i32, i32, i32, i32) {
    %c0_i32 = arith.constant 0 : i32
    %c0_i32_0 = arith.constant 0 : i32
    %c0_i32_1 = arith.constant 0 : i32
    %c0_i32_2 = arith.constant 0 : i32
    return %c0_i32, %arg0, %c0_i32_0, %c0_i32_1 : i32, i32, i32, i32
  }
  func.func @transform_3(%arg0: i32) -> (i32, i32, i32, i32) {
    %c0_i32 = arith.constant 0 : i32
    %c0_i32_0 = arith.constant 0 : i32
    %c0_i32_1 = arith.constant 0 : i32
    %c0_i32_2 = arith.constant 0 : i32
    return %c0_i32, %arg0, %c0_i32_0, %c0_i32_1 : i32, i32, i32, i32
  }
}

</mosaic_0001>

<llo_original>
// kernel: tpu_custom_call.1
$region0: #{tpu_custom_call.1}
  #allocation0 [shape = 'u32[]', space=smem, size = 0x4, offset = 0x4, fixed_abs, tag = 'smem constant byte address 0x4 - core index']
  #allocation1 [shape = 'u32[144,128]{1,0:T(1,128)}', space=vmem, size = 0x12000, scoped, tag = 'internal scratch']
  %s0 = inlined_call_operand.vmem [shape: f32[1,4,1], index: 0, kind: input, shape index: {}]
  %s1 = inlined_call_operand.vmem [shape: f32[1,4,1], index: 1, kind: input, shape index: {}]
  %s2 = inlined_call_operand.vmem [shape: f32[2,4,3,16], index: 2, kind: input, shape index: {}]
  %s3 = inlined_call_operand.vmem [shape: f32[2,4,3,16], index: 3, kind: output, shape index: {}]
  %s4 = sld [smem:[#allocation0]]
  $region22: #{tpu_custom_call.1} parent=0
    _
  %s6 = ssub.s32 1, %s4
  %s7 = scalar_select 0, %s6, %s4
  // Predicated region
  $region2: #{tpu_custom_call.1} parent=0 // pred_check
    _
  $region3: #{tpu_custom_call.1} parent=0 // pred_check_branch
    %9 = sbr.rel (0) target = $region5
  $region4: #{tpu_custom_call.1} parent=0 // pred_region
    _
  $region5: #{tpu_custom_call.1} parent=0 // pred_fallthru
    _
  // Predicated region
  $region6: #{tpu_custom_call.1} parent=0 // pred_check
    _
  $region7: #{tpu_custom_call.1} parent=0 // pred_check_branch
    %11 = sbr.rel (0) target = $region9
  $region8: #{tpu_custom_call.1} parent=0 // pred_region
    _
  $region9: #{tpu_custom_call.1} parent=0 // pred_fallthru
    _
  // Predicated region
  $region10: #{tpu_custom_call.1} parent=0 // pred_check
    _
  $region11: #{tpu_custom_call.1} parent=0 // pred_check_branch
    %13 = sbr.rel (0) target = $region13
  $region12: #{tpu_custom_call.1} parent=0 // pred_region
    _
  $region13: #{tpu_custom_call.1} parent=0 // pred_fallthru
    _
  %s14 = smul.u32 0, 4
  %v15 = vld [vmem:[%s2] sm:$0x7]
  %v16 = vld [vmem:[%s2 + $0x4] sm:$0x7]
  %v17 = vld [vmem:[%s2 + $0x8] sm:$0x7]
  %v18 = vld [vmem:[%s2 + $0xc] sm:$0x7]
  %v19 = vld [vmem:[%s2 + $0x10] sm:$0x7]
  %v20 = vld [vmem:[%s2 + $0x14] sm:$0x7]
  %v21 = vld [vmem:[%s2 + $0x18] sm:$0x7]
  %v22 = vld [vmem:[%s2 + $0x1c] sm:$0x7]
  %v23 = vmul.f32 %v15, %v15
  %v24 = vmul.f32 %v16, %v16
  %v25 = vmul.f32 %v17, %v17
  %v26 = vmul.f32 %v18, %v18
  %v27 = vmul.f32 %v19, %v19
  %v28 = vmul.f32 %v20, %v20
  %v29 = vmul.f32 %v21, %v21
  %v30 = vmul.f32 %v22, %v22
  %vm31 = vcmask 124928
  %v32 = vsel %vm31, %v23, 0.0
  %v33 = vrot.slane %v32, 4
  %v34 = vadd.f32 %v32, %v33
  %v35 = vrot.slane %v34, 2
  %v36 = vadd.f32 %v34, %v35
  %v37 = vrot.slane %v36, 1
  %v38 = vadd.f32 %v36, %v37
  %v39 = vsel %vm31, %v24, 0.0
  %v40 = vrot.slane %v39, 4
  %v41 = vadd.f32 %v39, %v40
  %v42 = vrot.slane %v41, 2
  %v43 = vadd.f32 %v41, %v42
  %v44 = vrot.slane %v43, 1
  %v45 = vadd.f32 %v43, %v44
  %v46 = vsel %vm31, %v25, 0.0
  %v47 = vrot.slane %v46, 4
  %v48 = vadd.f32 %v46, %v47
  %v49 = vrot.slane %v48, 2
  %v50 = vadd.f32 %v48, %v49
  %v51 = vrot.slane %v50, 1
  %v52 = vadd.f32 %v50, %v51
  %v53 = vsel %vm31, %v26, 0.0
  %v54 = vrot.slane %v53, 4
  %v55 = vadd.f32 %v53, %v54
  %v56 = vrot.slane %v55, 2
  %v57 = vadd.f32 %v55, %v56
  %v58 = vrot.slane %v57, 1
  %v59 = vadd.f32 %v57, %v58
  %v60 = vsel %vm31, %v27, 0.0
  %v61 = vrot.slane %v60, 4
  %v62 = vadd.f32 %v60, %v61
  %v63 = vrot.slane %v62, 2
  %v64 = vadd.f32 %v62, %v63
  %v65 = vrot.slane %v64, 1
  %v66 = vadd.f32 %v64, %v65
  %v67 = vsel %vm31, %v28, 0.0
  %v68 = vrot.slane %v67, 4
  %v69 = vadd.f32 %v67, %v68
  %v70 = vrot.slane %v69, 2
  %v71 = vadd.f32 %v69, %v70
  %v72 = vrot.slane %v71, 1
  %v73 = vadd.f32 %v71, %v72
  %v74 = vsel %vm31, %v29, 0.0
  %v75 = vrot.slane %v74, 4
  %v76 = vadd.f32 %v74, %v75
  %v77 = vrot.slane %v76, 2
  %v78 = vadd.f32 %v76, %v77
  %v79 = vrot.slane %v78, 1
  %v80 = vadd.f32 %v78, %v79
  %v81 = vsel %vm31, %v30, 0.0
  %v82 = vrot.slane %v81, 4
  %v83 = vadd.f32 %v81, %v82
  %v84 = vrot.slane %v83, 2
  %v85 = vadd.f32 %v83, %v84
  %v86 = vrot.slane %v85, 1
  %v87 = vadd.f32 %v85, %v86
  %v88 = vrsqrt.pop %v38
  %v89 = vmul.f32 %v38, %v88
  %vm90 = vcmp.eq.f32.partialorder %v38, inf
  %v91 = vsel %vm90, %v38, %v89
  %vm92 = vcmp.eq.f32.partialorder %v38, 0.0
  %v93 = vand.u32 %v38, 2147483648
  %v94 = vsel %vm92, %v93, %v91
  %v95 = vrsqrt.pop %v45
  %v96 = vmul.f32 %v45, %v95
  %vm97 = vcmp.eq.f32.partialorder %v45, inf
  %v98 = vsel %vm97, %v45, %v96
  %vm99 = vcmp.eq.f32.partialorder %v45, 0.0
  %v100 = vand.u32 %v45, 2147483648
  %v101 = vsel %vm99, %v100, %v98
  %v102 = vrsqrt.pop %v52
  %v103 = vmul.f32 %v52, %v102
  %vm104 = vcmp.eq.f32.partialorder %v52, inf
  %v105 = vsel %vm104, %v52, %v103
  %vm106 = vcmp.eq.f32.partialorder %v52, 0.0
  %v107 = vand.u32 %v52, 2147483648
  %v108 = vsel %vm106, %v107, %v105
  %v109 = vrsqrt.pop %v59
  %v110 = vmul.f32 %v59, %v109
  %vm111 = vcmp.eq.f32.partialorder %v59, inf
  %v112 = vsel %vm111, %v59, %v110
  %vm113 = vcmp.eq.f32.partialorder %v59, 0.0
  %v114 = vand.u32 %v59, 2147483648
  %v115 = vsel %vm113, %v114, %v112
  %v116 = vrsqrt.pop %v66
  %v117 = vmul.f32 %v66, %v116
  %vm118 = vcmp.eq.f32.partialorder %v66, inf
  %v119 = vsel %vm118, %v66, %v117
  %vm120 = vcmp.eq.f32.partialorder %v66, 0.0
  %v121 = vand.u32 %v66, 2147483648
  %v122 = vsel %vm120, %v121, %v119
  %v123 = vrsqrt.pop %v73
  %v124 = vmul.f32 %v73, %v123
  %vm125 = vcmp.eq.f32.partialorder %v73, inf
  %v126 = vsel %vm125, %v73, %v124
  %vm127 = vcmp.eq.f32.partialorder %v73, 0.0
  %v128 = vand.u32 %v73, 2147483648
  %v129 = vsel %vm127, %v128, %v126
  %v130 = vrsqrt.pop %v80
  %v131 = vmul.f32 %v80, %v130
  %vm132 = vcmp.eq.f32.partialorder %v80, inf
  %v133 = vsel %vm132, %v80, %v131
  %vm134 = vcmp.eq.f32.partialorder %v80, 0.0
  %v135 = vand.u32 %v80, 2147483648
  %v136 = vsel %vm134, %v135, %v133
  %v137 = vrsqrt.pop %v87
  %v138 = vmul.f32 %v87, %v137
  %vm139 = vcmp.eq.f32.partialorder %v87, inf
  %v140 = vsel %vm139, %v87, %v138
  %vm141 = vcmp.eq.f32.partialorder %v87, 0.0
  %v142 = vand.u32 %v87, 2147483648
  %v143 = vsel %vm141, %v142, %v140
  %v144 = vadd.f32 %v94, 1e-06
  %v145 = vadd.f32 %v101, 1e-06
  %v146 = vadd.f32 %v108, 1e-06
  %v147 = vadd.f32 %v115, 1e-06
  %v148 = vadd.f32 %v122, 1e-06
  %v149 = vadd.f32 %v129, 1e-06
  %v150 = vadd.f32 %v136, 1e-06
  %v151 = vadd.f32 %v143, 1e-06
  %vm160 = vcmask 1041409
  %v161 = vsel %vm160, %v145, %v144
  %vm162 = vcmask 1042434
  %v163 = vsel %vm162, %v146, %v161
  %vm164 = vcmask 1043459
  %v165 = vsel %vm164, %v147, %v163
  %v166 = vsel %vm160, %v149, %v148
  %v167 = vsel %vm162, %v150, %v166
  %v168 = vsel %vm164, %v151, %v167
  %vm171 = vcmask 125952
  %v172 = vsel %vm171, %v165, 0.0
  %v173 = vsel %vm171, %v168, 0.0
  %v174 = vadd.f32 %v172, %v173
  %175 = vadd.xlane.f32.xlu0 %v174
  %v176 = vpop.xlane.xlu0 %175
  %v177 = vmul.f32 %v176, 0.03125
  %v179 = vrot.slane %v177, 1
  %v180 = vrot.slane %v177, 2
  %v181 = vrot.slane %v177, 3
  %v186 = vsub.f32 %v144, %v177
  %v187 = vsub.f32 %v145, %v179
  %v188 = vsub.f32 %v146, %v180
  %v189 = vsub.f32 %v147, %v181
  %v190 = vsub.f32 %v148, %v177
  %v191 = vsub.f32 %v149, %v179
  %v192 = vsub.f32 %v150, %v180
  %v193 = vsub.f32 %v151, %v181
  %v194 = vmul.f32 %v186, %v186
  %v195 = vmul.f32 %v187, %v187
  %v196 = vmul.f32 %v188, %v188
  %v197 = vmul.f32 %v189, %v189
  %v198 = vmul.f32 %v190, %v190
  %v199 = vmul.f32 %v191, %v191
  %v200 = vmul.f32 %v192, %v192
  %v201 = vmul.f32 %v193, %v193
  %v210 = vrot.slane %v195, 7
  %v211 = vsel %vm160, %v210, %v194
  %v212 = vrot.slane %v196, 6
  %v213 = vsel %vm162, %v212, %v211
  %v214 = vrot.slane %v197, 5
  %v215 = vsel %vm164, %v214, %v213
  %v216 = vrot.slane %v199, 7
  %v217 = vsel %vm160, %v216, %v198
  %v218 = vrot.slane %v200, 6
  %v219 = vsel %vm162, %v218, %v217
  %v220 = vrot.slane %v201, 5
  %v221 = vsel %vm164, %v220, %v219
  %v224 = vsel %vm171, %v215, 0.0
  %v225 = vsel %vm171, %v221, 0.0
  %v226 = vadd.f32 %v224, %v225
  %227 = vadd.xlane.f32.xlu0 %v226
  %v228 = vpop.xlane.xlu0 %227
  %v229 = vmul.f32 %v228, 0.03125
  %v230 = vadd.f32 %v229, 1e-05
  %v231 = vrsqrt.pop %v230
  %s232 = scalar_lea.vmem %s0, %s14
  %v233 = vld [vmem:[%s232] sm:$0xf]
  %s234 = scalar_lea.vmem %s1, %s14
  %v235 = vld [vmem:[%s234] sm:$0xf]
  %v236 = vmul.f32 %v233, %v231
  %v237 = vmul.f32 %v236, %v177
  %v238 = vsub.f32 %v235, %v237
  %v239 = vrcp.pop %v144
  %v240 = vrcp.pop %v145
  %v241 = vrcp.pop %v146
  %v242 = vrcp.pop %v147
  %v243 = vrcp.pop %v148
  %v244 = vrcp.pop %v149
  %v245 = vrcp.pop %v150
  %v246 = vrcp.pop %v151
  %248 = vset.pattern.permute.xlu0 0
  %249 = vperm.xlu0 %248, %v238
  %v250 = vpop.permute.xlu0 %249
  %v260 = vsel %vm160, %v240, %v239
  %v261 = vsel %vm162, %v241, %v260
  %v262 = vsel %vm164, %v242, %v261
  %v263 = vsel %vm160, %v244, %v243
  %v264 = vsel %vm162, %v245, %v263
  %v265 = vsel %vm164, %v246, %v264
  %v268 = vmul.f32 %v250, %v262
  %v269 = vmul.f32 %v250, %v265
  %271 = vset.pattern.permute.xlu0 0
  %272 = vperm.xlu0 %271, %v236
  %v273 = vpop.permute.xlu0 %272
  %v275 = vadd.f32 %v273, %v268
  %v276 = vadd.f32 %v273, %v269
  %v280 = vunpack.c.l.s4 1966171168
  %v281 = vunpack.c.0.s8 %v280
  %v282 = vlaneseq
  %v283 = vshrl.u32 %v282, 7
  %v284 = vsub.s32 %v281, %v283
  %v285 = vrot.slane %v275, %v284
  %v286 = vcombine.high %v285, %v285
  %v288 = vunpack.c.l.s4 1966171168
  %v289 = vunpack.c.0.s8 %v288
  %v290 = vlaneseq
  %v291 = vshrl.u32 %v290, 7
  %v292 = vsub.s32 %v289, %v291
  %v293 = vrot.slane %v285, %v292
  %v295 = vunpack.c.l.s4 1966171168
  %v296 = vunpack.c.0.s8 %v295
  %v297 = vlaneseq
  %v298 = vshrl.u32 %v297, 7
  %v299 = vsub.s32 %v296, %v298
  %v300 = vrot.slane %v286, %v299
  %v301 = vcombine.high %v293, %v293
  %v302 = vcombine.high %v300, %v300
  %v304 = vunpack.c.l.s4 1966171168
  %v305 = vunpack.c.0.s8 %v304
  %v306 = vlaneseq
  %v307 = vshrl.u32 %v306, 7
  %v308 = vsub.s32 %v305, %v307
  %v309 = vrot.slane %v276, %v308
  %v310 = vcombine.high %v309, %v309
  %v312 = vunpack.c.l.s4 1966171168
  %v313 = vunpack.c.0.s8 %v312
  %v314 = vlaneseq
  %v315 = vshrl.u32 %v314, 7
  %v316 = vsub.s32 %v313, %v315
  %v317 = vrot.slane %v309, %v316
  %v319 = vunpack.c.l.s4 1966171168
  %v320 = vunpack.c.0.s8 %v319
  %v321 = vlaneseq
  %v322 = vshrl.u32 %v321, 7
  %v323 = vsub.s32 %v320, %v322
  %v324 = vrot.slane %v310, %v323
  %v325 = vcombine.high %v317, %v317
  %v326 = vcombine.high %v324, %v324
  %v327 = vlaneseq
  %v328 = vshrl.u32 %v327, 7
  %v329 = vsub.s32 0, %v328
  %v330 = vrot.slane %v293, %v329
  %v331 = vlaneseq
  %v332 = vshrl.u32 %v331, 7
  %v333 = vsub.s32 0, %v332
  %v334 = vrot.slane %v300, %v333
  %v335 = vlaneseq
  %v336 = vshrl.u32 %v335, 7
  %v337 = vsub.s32 0, %v336
  %v338 = vrot.slane %v301, %v337
  %v339 = vlaneseq
  %v340 = vshrl.u32 %v339, 7
  %v341 = vsub.s32 0, %v340
  %v342 = vrot.slane %v302, %v341
  %v343 = vlaneseq
  %v344 = vshrl.u32 %v343, 7
  %v345 = vsub.s32 0, %v344
  %v346 = vrot.slane %v317, %v345
  %v347 = vlaneseq
  %v348 = vshrl.u32 %v347, 7
  %v349 = vsub.s32 0, %v348
  %v350 = vrot.slane %v324, %v349
  %v351 = vlaneseq
  %v352 = vshrl.u32 %v351, 7
  %v353 = vsub.s32 0, %v352
  %v354 = vrot.slane %v325, %v353
  %v355 = vlaneseq
  %v356 = vshrl.u32 %v355, 7
  %v357 = vsub.s32 0, %v356
  %v358 = vrot.slane %v326, %v357
  %v367 = vmul.f32 %v15, %v330
  %v368 = vmul.f32 %v16, %v334
  %v369 = vmul.f32 %v17, %v338
  %v370 = vmul.f32 %v18, %v342
  %v371 = vmul.f32 %v19, %v346
  %v372 = vmul.f32 %v20, %v350
  %v373 = vmul.f32 %v21, %v354
  %v374 = vmul.f32 %v22, %v358
  %375 = vst.msk [vmem:[%s3] sm:$0x7] %vm31, %v367
  %376 = vst.msk [vmem:[%s3 + $0x4] sm:$0x7] %vm31, %v368
  %377 = vst.msk [vmem:[%s3 + $0x8] sm:$0x7] %vm31, %v369
  %378 = vst.msk [vmem:[%s3 + $0xc] sm:$0x7] %vm31, %v370
  %379 = vst.msk [vmem:[%s3 + $0x10] sm:$0x7] %vm31, %v371
  %380 = vst.msk [vmem:[%s3 + $0x14] sm:$0x7] %vm31, %v372
  %381 = vst.msk [vmem:[%s3 + $0x18] sm:$0x7] %vm31, %v373
  %382 = vst.msk [vmem:[%s3 + $0x1c] sm:$0x7] %vm31, %v374
  // Predicated region
  $region14: #{tpu_custom_call.1} parent=0 // pred_check
    _
  $region15: #{tpu_custom_call.1} parent=0 // pred_check_branch
    %384 = sbr.rel (0) target = $region17
  $region16: #{tpu_custom_call.1} parent=0 // pred_region
    _
  $region17: #{tpu_custom_call.1} parent=0 // pred_fallthru
    _
  // Predicated region
  $region18: #{tpu_custom_call.1} parent=0 // pred_check
    _
  $region19: #{tpu_custom_call.1} parent=0 // pred_check_branch
    %386 = sbr.rel (0) target = $region21
  $region20: #{tpu_custom_call.1} parent=0 // pred_region
    _
  $region21: #{tpu_custom_call.1} parent=0 // pred_fallthru
    _

</llo_original>
